<compile_context>
chip_gen: v7x
topology: tpu7x:2x2x1
jax: 0.10.0
libtpu: 0.0.40
codegen_flags: <defaults>
</compile_context>

<pallas_src>
import functools

import jax
import jax.numpy as jnp
from jax.experimental import pallas as pl
from jax.experimental.pallas import tpu as pltpu

BN_EPS = 1e-5
LEAKY_SLOPE = 0.01               # nn.LeakyReLU default
_VMEM_LIMIT = 32 * 1024 * 1024   # safe on v5e/v6e/v7x


def _row_tile(n, max_rows):
    """Largest legal row tile: full n if it fits, else a multiple of 8."""
    if n <= max_rows:
        return n                           # block == full array dim -> legal
    return max(8, (max_rows // 8) * 8)


def _col_tile(m, max_cols):
    if m <= max_cols:
        return m                           # block == full array dim -> legal
    return max(128, (max_cols // 128) * 128)


# ----------------------------------------------------------------------------
# Pass 1: per-feature column sum / sum-of-squares via MXU (ones @ x).
# Output blocks are resident across the row-tile axis ("arbitrary").
# ----------------------------------------------------------------------------
def stats_kernel(x_ref, sum_ref, sq_ref, ones_ref, *, n_rows, needs_mask):
    i = pl.program_id(0)

    @pl.when(i == 0)
    def _():
        ones_ref[...] = jnp.ones_like(ones_ref)   # hoisted: built once, reused
        sum_ref[...] = jnp.zeros_like(sum_ref)
        sq_ref[...] = jnp.zeros_like(sq_ref)

    x = x_ref[...].astype(jnp.float32)            # (tm, K)
    if needs_mask:
        tm = x.shape[0]
        row = jax.lax.broadcasted_iota(jnp.int32, (tm, 1), 0) + i * tm
        x = jnp.where(row < n_rows, x, 0.0)       # mask partial-tile rows

    ones = ones_ref[...]                          # (8, tm)
    sum_ref[...] += jnp.dot(ones, x, preferred_element_type=jnp.float32)
    sq_ref[...] += jnp.dot(ones, x * x, preferred_element_type=jnp.float32)


# ----------------------------------------------------------------------------
# Pass 2: z = (x * s) @ W^T + bf, LeakyReLU.  Tiled over rows and out-columns.
# ----------------------------------------------------------------------------
def apply_kernel(x_ref, s_ref, wt_ref, bf_ref, o_ref, *, compute_dtype):
    x = x_ref[...].astype(jnp.float32)                       # (tm, K)
    xs = (x * s_ref[...]).astype(compute_dtype)              # lane-broadcast BN scale
    z = jnp.dot(xs, wt_ref[...].astype(compute_dtype),
                preferred_element_type=jnp.float32)          # (tm, tn) f32 acc
    z = z + bf_ref[...]
    o_ref[...] = jnp.where(z > 0, z, LEAKY_SLOPE * z).astype(o_ref.dtype)


# ----------------------------------------------------------------------------
# Wrapper
# ----------------------------------------------------------------------------
def gcn11_forward(x, gamma, beta, weight, bias, *,
                  matmul_dtype=jnp.bfloat16,
                  stats_block_rows=1024,
                  apply_block_rows=256,
                  apply_block_cols=512):
    """x: (N, in_dim); weight: (out_dim, in_dim) PyTorch layout; bias: (out_dim,).

    matmul_dtype=bfloat16 by default (MXU-native, f32 accumulation); pass
    jnp.float32 for bit-tighter results at lower throughput.
    """
    n, in_dim = x.shape
    out_dim = weight.shape[0]

    # Cap row tiles so one f32 x-tile stays small enough to double-buffer
    # comfortably under the scoped VMEM limit (stats tile larger than apply's).
    stats_cap = max(8, (8 * 1024 * 1024) // (in_dim * 4))
    apply_cap = max(8, (4 * 1024 * 1024) // (in_dim * 4))

    # --- Pass 1: batch statistics (serial accumulation over row tiles) -------
    tm_s = _row_tile(n, min(stats_block_rows, stats_cap))
    nr_s = pl.cdiv(n, tm_s)
    colsum8, colsq8 = pl.pallas_call(
        functools.partial(stats_kernel, n_rows=n, needs_mask=(n % tm_s != 0)),
        out_shape=(jax.ShapeDtypeStruct((8, in_dim), jnp.float32),
                   jax.ShapeDtypeStruct((8, in_dim), jnp.float32)),
        grid_spec=pltpu.PrefetchScalarGridSpec(
            num_scalar_prefetch=0,
            grid=(nr_s,),
            in_specs=[pl.BlockSpec((tm_s, in_dim), lambda i: (i, 0))],
            out_specs=[pl.BlockSpec((8, in_dim), lambda i: (0, 0)),
                       pl.BlockSpec((8, in_dim), lambda i: (0, 0))],
            scratch_shapes=[pltpu.VMEM((8, tm_s), jnp.float32)]),
        compiler_params=pltpu.CompilerParams(
            dimension_semantics=("arbitrary",),
            vmem_limit_bytes=_VMEM_LIMIT),
    )(x)

    # --- Fold BN into (s, bf): tiny O(K + M) work + one matvec, plain XLA ----
    inv_n = 1.0 / float(n)
    mean = colsum8[0] * inv_n
    var = jnp.maximum(colsq8[0] * inv_n - mean * mean, 0.0)   # clamp cancellation
    s = gamma.astype(jnp.float32) * jax.lax.rsqrt(var + BN_EPS)        # (K,)
    shift = beta.astype(jnp.float32) - mean * s                         # (K,)
    wt = weight.T.astype(jnp.float32)                                   # (K, M)
    bf = (bias.astype(jnp.float32) + shift @ wt).reshape(1, out_dim)    # (1, M)
    s_row = s.reshape(1, in_dim)
    wt_c = wt.astype(matmul_dtype)

    # --- Pass 2: row/col-tiled apply + LeakyReLU (fully parallel grid) -------
    tm = _row_tile(n, min(apply_block_rows, apply_cap))
    tn = _col_tile(out_dim, apply_block_cols)
    nr = pl.cdiv(n, tm)
    nc = pl.cdiv(out_dim, tn)

    x_item = jnp.dtype(x.dtype).itemsize
    cost = pl.CostEstimate(
        flops=2 * n * in_dim * out_dim,
        transcendentals=0,
        bytes_accessed=(n * in_dim * x_item
                        + in_dim * out_dim * jnp.dtype(matmul_dtype).itemsize
                        + n * out_dim * x_item))

    out = pl.pallas_call(
        functools.partial(apply_kernel, compute_dtype=matmul_dtype),
        out_shape=jax.ShapeDtypeStruct((n, out_dim), x.dtype),
        grid_spec=pltpu.PrefetchScalarGridSpec(
            num_scalar_prefetch=0,
            grid=(nr, nc),
            in_specs=[pl.BlockSpec((tm, in_dim), lambda i, j: (i, 0)),
                      pl.BlockSpec((1, in_dim), lambda i, j: (0, 0)),
                      pl.BlockSpec((in_dim, tn), lambda i, j: (0, j)),
                      pl.BlockSpec((1, tn), lambda i, j: (0, j))],
            out_specs=pl.BlockSpec((tm, tn), lambda i, j: (i, j))),
        compiler_params=pltpu.CompilerParams(
            dimension_semantics=("parallel", "parallel"),
            vmem_limit_bytes=_VMEM_LIMIT),
        cost_estimate=cost,
    )(x, s_row, wt_c, bf)

    return out


def reference_forward(x, gamma, beta, weight, bias):
    """Pure-JAX reference (training-mode BN, biased variance)."""
    mean = jnp.mean(x, axis=0, keepdims=True)
    var = jnp.mean((x - mean) ** 2, axis=0, keepdims=True)
    x_hat = (x - mean) / jnp.sqrt(var + BN_EPS)
    y = x_hat * gamma + beta
    z = y @ weight.T + bias
    return jnp.where(z > 0, z, LEAKY_SLOPE * z)


if __name__ == "__main__":
    key = jax.random.PRNGKey(0)
    k_x, k_w, k_b, k_x2, k_w2, k_b2 = jax.random.split(key, 6)

    # --- Case 1: small aligned shapes, GCN11(in_dim=32, out_dim=32, p=0.0) ---
    N, IN_DIM, OUT_DIM = 8, 32, 32
    x = jax.random.normal(k_x, (N, IN_DIM), dtype=jnp.float32)
    gamma = jnp.ones((IN_DIM,), jnp.float32)      # BatchNorm1d init
    beta = jnp.zeros((IN_DIM,), jnp.float32)
    bound = IN_DIM ** -0.5
    weight = jax.random.uniform(k_w, (OUT_DIM, IN_DIM), jnp.float32,
                                minval=-bound, maxval=bound)
    bias = jax.random.uniform(k_b, (OUT_DIM,), jnp.float32,
                              minval=-bound, maxval=bound)

    ref = reference_forward(x, gamma, beta, weight, bias)

    out_f32 = jax.block_until_ready(
        gcn11_forward(x, gamma, beta, weight, bias, matmul_dtype=jnp.float32))
    assert out_f32.shape == (N, OUT_DIM)
    assert jnp.allclose(out_f32, ref, atol=1e-4, rtol=1e-4), "f32 mismatch"

    out_bf16 = jax.block_until_ready(
        gcn11_forward(x, gamma, beta, weight, bias))   # default bf16 matmul
    assert jnp.allclose(out_bf16, ref, atol=3e-2, rtol=3e-2), "bf16 mismatch"

    # --- Case 2: ragged shapes / forced small tiles (exercises masking) ------
    N2, IN2, OUT2 = 13, 48, 40
    x2 = jax.random.normal(k_x2, (N2, IN2), dtype=jnp.float32)
    gamma2 = 1.0 + 0.1 * jax.random.normal(jax.random.PRNGKey(1), (IN2,), jnp.float32)
    beta2 = 0.1 * jax.random.normal(jax.random.PRNGKey(2), (IN2,), jnp.float32)
    bound2 = IN2 ** -0.5
    weight2 = jax.random.uniform(k_w2, (OUT2, IN2), jnp.float32,
                                 minval=-bound2, maxval=bound2)
    bias2 = jax.random.uniform(k_b2, (OUT2,), jnp.float32,
                               minval=-bound2, maxval=bound2)

    ref2 = reference_forward(x2, gamma2, beta2, weight2, bias2)
    out2 = jax.block_until_ready(
        gcn11_forward(x2, gamma2, beta2, weight2, bias2,
                      matmul_dtype=jnp.float32,
                      stats_block_rows=8, apply_block_rows=8))
    assert out2.shape == (N2, OUT2)
    assert jnp.allclose(out2, ref2, atol=1e-4, rtol=1e-4), "ragged mismatch"

    print("KERNEL_OK")
</pallas_src>

<mosaic_0001>
module attributes {stable_mosaic.version = 11 : i64} {
  func.func @stats_kernel(%arg0: i32, %arg1: memref<8x32xf32, #tpu.memory_space<vmem>>, %arg2: memref<8x32xf32, #tpu.memory_space<vmem>>, %arg3: memref<8x32xf32, #tpu.memory_space<vmem>>, %arg4: memref<8x8xf32, #tpu.memory_space<vmem>>) attributes {dimension_semantics = [#tpu.dimension_semantics<arbitrary>], iteration_bounds = array<i64: 1>, scalar_prefetch = 0 : i64, scratch_operands = 1 : i64, tpu.core_type = #tpu.core_type<tc>, window_params = [{transform_indices = @transform_0, window_bounds = array<i64: 8, 32>}, {pipeline_mode = #tpu.pipeline_mode<synchronous>, transform_indices = @transform_1, window_bounds = array<i64: 8, 32>}, {pipeline_mode = #tpu.pipeline_mode<synchronous>, transform_indices = @transform_2, window_bounds = array<i64: 8, 32>}]} {
    %c0_i32 = arith.constant 0 : i32
    %0 = arith.cmpi eq, %arg0, %c0_i32 : i32
    %1 = arith.extui %0 : i1 to i32
    %c0_i32_0 = arith.constant 0 : i32
    %2 = arith.cmpi ne, %1, %c0_i32_0 : i32
    scf.if %2 {
      %cst_13 = arith.constant 1.000000e+00 : f32
      %14 = vector.broadcast %cst_13 : f32 to vector<8x8xf32>
      %c0_14 = arith.constant 0 : index
      %c0_15 = arith.constant 0 : index
      %15 = vector.load %arg4[%c0_14, %c0_15] : memref<8x8xf32, #tpu.memory_space<vmem>>, vector<8x8xf32>
      tpu.vector_store %arg4[%c0_14, %c0_15], %14 {strides = array<i32>} : memref<8x8xf32, #tpu.memory_space<vmem>>, vector<8x8xf32>,
      %cst_16 = arith.constant 0.000000e+00 : f32
      %16 = vector.broadcast %cst_16 : f32 to vector<8x32xf32>
      %c0_17 = arith.constant 0 : index
      %c0_18 = arith.constant 0 : index
      %17 = vector.load %arg2[%c0_17, %c0_18] : memref<8x32xf32, #tpu.memory_space<vmem>>, vector<8x32xf32>
      tpu.vector_store %arg2[%c0_17, %c0_18], %16 {strides = array<i32>} : memref<8x32xf32, #tpu.memory_space<vmem>>, vector<8x32xf32>,
      %cst_19 = arith.constant 0.000000e+00 : f32
      %18 = vector.broadcast %cst_19 : f32 to vector<8x32xf32>
      %c0_20 = arith.constant 0 : index
      %c0_21 = arith.constant 0 : index
      %19 = vector.load %arg3[%c0_20, %c0_21] : memref<8x32xf32, #tpu.memory_space<vmem>>, vector<8x32xf32>
      tpu.vector_store %arg3[%c0_20, %c0_21], %18 {strides = array<i32>} : memref<8x32xf32, #tpu.memory_space<vmem>>, vector<8x32xf32>,
    } else {
    }
    %c0 = arith.constant 0 : index
    %c0_1 = arith.constant 0 : index
    %3 = vector.load %arg1[%c0, %c0_1] : memref<8x32xf32, #tpu.memory_space<vmem>>, vector<8x32xf32>
    %c0_2 = arith.constant 0 : index
    %c0_3 = arith.constant 0 : index
    %4 = vector.load %arg4[%c0_2, %c0_3] : memref<8x8xf32, #tpu.memory_space<vmem>>, vector<8x8xf32>
    %c0_4 = arith.constant 0 : index
    %c0_5 = arith.constant 0 : index
    %5 = vector.load %arg2[%c0_4, %c0_5] : memref<8x32xf32, #tpu.memory_space<vmem>>, vector<8x32xf32>
    %cst = arith.constant dense<0.000000e+00> : vector<8x32xf32>
    %6 = tpu.matmul %4, %3, %cst {dimension_numbers = #tpu.dot_dimension_numbers<[1], [0], [0], [1], [0, 0, 1, 1], [], []>} : vector<8x8xf32>, vector<8x32xf32>, vector<8x32xf32> -> vector<8x32xf32>
    %7 = arith.addf %5, %6 : vector<8x32xf32>
    %c0_6 = arith.constant 0 : index
    %c0_7 = arith.constant 0 : index
    %8 = vector.load %arg2[%c0_6, %c0_7] : memref<8x32xf32, #tpu.memory_space<vmem>>, vector<8x32xf32>
    tpu.vector_store %arg2[%c0_6, %c0_7], %7 {strides = array<i32>} : memref<8x32xf32, #tpu.memory_space<vmem>>, vector<8x32xf32>,
    %c0_8 = arith.constant 0 : index
    %c0_9 = arith.constant 0 : index
    %9 = vector.load %arg3[%c0_8, %c0_9] : memref<8x32xf32, #tpu.memory_space<vmem>>, vector<8x32xf32>
    %10 = arith.mulf %3, %3 : vector<8x32xf32>
    %cst_10 = arith.constant dense<0.000000e+00> : vector<8x32xf32>
    %11 = tpu.matmul %4, %10, %cst_10 {dimension_numbers = #tpu.dot_dimension_numbers<[1], [0], [0], [1], [0, 0, 1, 1], [], []>} : vector<8x8xf32>, vector<8x32xf32>, vector<8x32xf32> -> vector<8x32xf32>
    %12 = arith.addf %9, %11 : vector<8x32xf32>
    %c0_11 = arith.constant 0 : index
    %c0_12 = arith.constant 0 : index
    %13 = vector.load %arg3[%c0_11, %c0_12] : memref<8x32xf32, #tpu.memory_space<vmem>>, vector<8x32xf32>
    tpu.vector_store %arg3[%c0_11, %c0_12], %12 {strides = array<i32>} : memref<8x32xf32, #tpu.memory_space<vmem>>, vector<8x32xf32>,
    return
  }
  func.func @transform_0(%arg0: i32) -> (i32, i32) {
    %c0_i32 = arith.constant 0 : i32
    %c0_i32_0 = arith.constant 0 : i32
    return %arg0, %c0_i32 : i32, i32
  }
  func.func @transform_1(%arg0: i32) -> (i32, i32) {
    %c0_i32 = arith.constant 0 : i32
    %c0_i32_0 = arith.constant 0 : i32
    %c0_i32_1 = arith.constant 0 : i32
    return %c0_i32, %c0_i32_0 : i32, i32
  }
  func.func @transform_2(%arg0: i32) -> (i32, i32) {
    %c0_i32 = arith.constant 0 : i32
    %c0_i32_0 = arith.constant 0 : i32
    %c0_i32_1 = arith.constant 0 : i32
    return %c0_i32, %c0_i32_0 : i32, i32
  }
}

</mosaic_0001>

<llo_original>
// kernel: tpu_custom_call.1
$region0: #{tpu_custom_call.1}
  #allocation0 [shape = 'u32[]', space=smem, size = 0x4, offset = 0x4, fixed_abs, tag = 'smem constant byte address 0x4 - core index']
  #allocation1 [shape = 'u32[144,128]{1,0:T(1,128)}', space=vmem, size = 0x12000, scoped, tag = 'internal scratch']
  #allocation2 [shape = 'f32[8,8]{1,0:T(8,128)}', space=vmem, size = 0x1000, scoped, tag = 'scratch operand']
  %s0 = inlined_call_operand.hbm [shape: f32[8,32], index: 0, kind: input, shape index: {}]
  %s1 = inlined_call_operand.hbm [shape: f32[8,32], index: 1, kind: output, shape index: {0}]
  %s2 = inlined_call_operand.hbm [shape: f32[8,32], index: 2, kind: output, shape index: {1}]
  %3 = xla_tuple %s1, %s2
  %s4 = sld [smem:[#allocation0]]
  $region30: #{tpu_custom_call.1} parent=0
    _
  %s6 = ssub.s32 1, %s4
  %s7 = scalar_select 0, %s6, %s4
  $region1: #{tpu_custom_call.1} parent=0
    #allocation3 [shape = 'u8[4096]{0}', space=vmem, size = 0x1000, scoped, tag = 'input window, operand 0, single buffered']
    #allocation4 [shape = 's32[1]{0}', space=sflag, size = 0x4, scoped, tag = 'scoped memory for tpu_custom_call.1']
    #allocation5 [shape = 's32[1]{0}', space=sflag, size = 0x4, scoped, tag = 'scoped memory for tpu_custom_call.1']
    #allocation6 [shape = 'u8[4096]{0}', space=vmem, size = 0x1000, scoped, tag = 'output window, operand 0, single buffered']
    #allocation7 [shape = 'u8[4096]{0}', space=vmem, size = 0x1000, scoped, tag = 'output window, operand 1, single buffered']
    #allocation8 [shape = 's32[1]{0}', space=sflag, size = 0x4, scoped, tag = 'scoped memory for tpu_custom_call.1']
    %8 = vsyncpa [#allocation4], 0
    %9 = vsyncpa [#allocation5], 0
    %10 = vsyncpa [#allocation8], 0
    // Predicated region
    $region2: #{tpu_custom_call.1} parent=1 // pred_check
      _
    $region3: #{tpu_custom_call.1} parent=1 // pred_check_branch
      %12 = sbr.rel (0) target = $region5
    $region4: #{tpu_custom_call.1} parent=1 // pred_region
      %s14 = ssub.s32 128, 128
      %15 = vsyncadd [#allocation4], %s14
      %s17 = sshll.u32 [#allocation3], 4
      %s18 = int_to_ptr.vmem [resolvable:$true] %s17
      %20 = dma.hbm_to_vmem [thread:$0]  %s0, 128, %s18, [#allocation4]
    $region5: #{tpu_custom_call.1} parent=1 // pred_fallthru
      _
    // Predicated region
    $region6: #{tpu_custom_call.1} parent=1 // pred_check
      _
    $region7: #{tpu_custom_call.1} parent=1 // pred_check_branch
      %22 = sbr.rel (0) target = $region9
    $region8: #{tpu_custom_call.1} parent=1 // pred_region
      %23 = dma.done [#allocation4], 128
    $region9: #{tpu_custom_call.1} parent=1 // pred_fallthru
      _
    %p24 = scmp.eq.s32.totalorder 0, 0
    // Predicated region
    $region10: #{tpu_custom_call.1} parent=1 // pred_check
      %p25 = pneg %p24
    $region11: #{tpu_custom_call.1} parent=1 // pred_check_branch
      %27 = sbr.rel (%p25) target = $region13
    $region12: #{tpu_custom_call.1} parent=1 // pred_region
      %vm28 = vcmask 64512
      %29 = vst.msk [vmem:[#allocation2] sm:$0xff] %vm28, 1.0
      %vm30 = vcmask 261120
      %31 = vst.msk [vmem:[#allocation6] sm:$0xff] %vm30, 0.0
      %32 = vst.msk [vmem:[#allocation7] sm:$0xff] %vm30, 0.0
    $region13: #{tpu_custom_call.1} parent=1 // pred_fallthru
      _
    %v33 = vld [vmem:[#allocation3] sm:$0xff]
    %v34 = vld [vmem:[#allocation2] sm:$0xff]
    %v35 = vld [vmem:[#allocation6] sm:$0xff]
    %vm36 = vcmask 64512
    %v38 = vsel %vm36, %v34, 0
    %40 = vmatprep.subr.mxu0 0.0
    %41 = vmatpush1.msra.mxu0 %v33
    %42 = vmatprep.subr.mxu0 0.0
    %43 = vmatpush1.msra.mxu0 0.0
    %44 = vmatprep.subr.mxu0 0.0
    %45 = vmatpush1.msra.mxu0 0.0
    %46 = vmatprep.subr.mxu0 0.0
    %47 = vmatpush1.msra.mxu0 0.0
    %48 = vmatprep.subr.mxu0 0.0
    %49 = vmatpush1.msra.mxu0 0.0
    %50 = vmatprep.subr.mxu0 0.0
    %51 = vmatpush1.msra.mxu0 0.0
    %52 = vmatprep.subr.mxu0 0.0
    %53 = vmatpush1.msra.mxu0 0.0
    %54 = vmatprep.subr.mxu0 0.0
    %55 = vmatpush1.msra.mxu0 0.0
    %56 = vmatprep.subr.mxu0 0.0
    %57 = vmatpush1.msra.mxu0 0.0
    %58 = vmatprep.subr.mxu0 0.0
    %59 = vmatpush1.msra.mxu0 0.0
    %60 = vmatprep.subr.mxu0 0.0
    %61 = vmatpush1.msra.mxu0 0.0
    %62 = vmatprep.subr.mxu0 0.0
    %63 = vmatpush1.msra.mxu0 0.0
    %64 = vmatprep.subr.mxu0 0.0
    %65 = vmatpush1.msra.mxu0 0.0
    %66 = vmatprep.subr.mxu0 0.0
    %67 = vmatpush1.msra.mxu0 0.0
    %68 = vmatprep.subr.mxu0 0.0
    %69 = vmatpush1.msra.mxu0 0.0
    %70 = vmatprep.subr.mxu0 0.0
    %71 = vmatpush1.msra.mxu0 0.0
    %72 = vmatprep.subr.mxu0 0.0
    %73 = vmatpush1.msra.mxu0 0.0
    %74 = vmatprep.subr.mxu0 0.0
    %75 = vmatpush1.msra.mxu0 0.0
    %76 = vmatprep.subr.mxu0 0.0
    %77 = vmatpush1.msra.mxu0 0.0
    %78 = vmatprep.subr.mxu0 0.0
    %79 = vmatpush1.msra.mxu0 0.0
    %80 = vmatprep.subr.mxu0 0.0
    %81 = vmatpush1.msra.mxu0 0.0
    %82 = vmatprep.subr.mxu0 0.0
    %83 = vmatpush1.msra.mxu0 0.0
    %84 = vmatprep.subr.mxu0 0.0
    %85 = vmatpush1.msra.mxu0 0.0
    %86 = vmatprep.subr.mxu0 0.0
    %87 = vmatpush1.msra.mxu0 0.0
    %88 = vmatprep.subr.mxu0 0.0
    %89 = vmatpush1.msra.mxu0 0.0
    %90 = vmatprep.subr.mxu0 0.0
    %91 = vmatpush1.msra.mxu0 0.0
    %92 = vmatprep.subr.mxu0 0.0
    %93 = vmatpush1.msra.mxu0 0.0
    %94 = vmatprep.subr.mxu0 0.0
    %95 = vmatpush1.msra.mxu0 0.0
    %96 = vmatprep.subr.mxu0 0.0
    %97 = vmatpush1.msra.mxu0 0.0
    %98 = vmatprep.subr.mxu0 0.0
    %99 = vmatpush1.msra.mxu0 0.0
    %100 = vmatprep.subr.mxu0 0.0
    %101 = vmatpush1.msra.mxu0 0.0
    %102 = vmatprep.subr.mxu0 0.0
    %103 = vmatpush1.msra.mxu0 0.0
    %104 = vmatprep.mubr.f32.mxu0 0.0
    %105 = vmatmul.mubr.f32.gmra.mrb[0].mxu0 %v38
    %v106 = vpop.f32.mrb[0].mxu0
    %v107 = vadd.f32 0.0, %v106
    %v108 = vpop.f32.mrb[0].mxu0
    %109 = vdwg.mxu0
    %v110 = vadd.f32 %v35, %v107
    %vm111 = vcmask 261120
    %112 = vst.msk [vmem:[#allocation6] sm:$0xff] %vm111, %v110
    %v113 = vld [vmem:[#allocation7] sm:$0xff]
    %v114 = vmul.f32 %v33, %v33
    %115 = vmatprep.subr.mxu0 0.0
    %116 = vmatpush1.msra.mxu0 %v114
    %117 = vmatprep.subr.mxu0 0.0
    %118 = vmatpush1.msra.mxu0 0.0
    %119 = vmatprep.subr.mxu0 0.0
    %120 = vmatpush1.msra.mxu0 0.0
    %121 = vmatprep.subr.mxu0 0.0
    %122 = vmatpush1.msra.mxu0 0.0
    %123 = vmatprep.subr.mxu0 0.0
    %124 = vmatpush1.msra.mxu0 0.0
    %125 = vmatprep.subr.mxu0 0.0
    %126 = vmatpush1.msra.mxu0 0.0
    %127 = vmatprep.subr.mxu0 0.0
    %128 = vmatpush1.msra.mxu0 0.0
    %129 = vmatprep.subr.mxu0 0.0
    %130 = vmatpush1.msra.mxu0 0.0
    %131 = vmatprep.subr.mxu0 0.0
    %132 = vmatpush1.msra.mxu0 0.0
    %133 = vmatprep.subr.mxu0 0.0
    %134 = vmatpush1.msra.mxu0 0.0
    %135 = vmatprep.subr.mxu0 0.0
    %136 = vmatpush1.msra.mxu0 0.0
    %137 = vmatprep.subr.mxu0 0.0
    %138 = vmatpush1.msra.mxu0 0.0
    %139 = vmatprep.subr.mxu0 0.0
    %140 = vmatpush1.msra.mxu0 0.0
    %141 = vmatprep.subr.mxu0 0.0
    %142 = vmatpush1.msra.mxu0 0.0
    %143 = vmatprep.subr.mxu0 0.0
    %144 = vmatpush1.msra.mxu0 0.0
    %145 = vmatprep.subr.mxu0 0.0
    %146 = vmatpush1.msra.mxu0 0.0
    %147 = vmatprep.subr.mxu0 0.0
    %148 = vmatpush1.msra.mxu0 0.0
    %149 = vmatprep.subr.mxu0 0.0
    %150 = vmatpush1.msra.mxu0 0.0
    %151 = vmatprep.subr.mxu0 0.0
    %152 = vmatpush1.msra.mxu0 0.0
    %153 = vmatprep.subr.mxu0 0.0
    %154 = vmatpush1.msra.mxu0 0.0
    %155 = vmatprep.subr.mxu0 0.0
    %156 = vmatpush1.msra.mxu0 0.0
    %157 = vmatprep.subr.mxu0 0.0
    %158 = vmatpush1.msra.mxu0 0.0
    %159 = vmatprep.subr.mxu0 0.0
    %160 = vmatpush1.msra.mxu0 0.0
    %161 = vmatprep.subr.mxu0 0.0
    %162 = vmatpush1.msra.mxu0 0.0
    %163 = vmatprep.subr.mxu0 0.0
    %164 = vmatpush1.msra.mxu0 0.0
    %165 = vmatprep.subr.mxu0 0.0
    %166 = vmatpush1.msra.mxu0 0.0
    %167 = vmatprep.subr.mxu0 0.0
    %168 = vmatpush1.msra.mxu0 0.0
    %169 = vmatprep.subr.mxu0 0.0
    %170 = vmatpush1.msra.mxu0 0.0
    %171 = vmatprep.subr.mxu0 0.0
    %172 = vmatpush1.msra.mxu0 0.0
    %173 = vmatprep.subr.mxu0 0.0
    %174 = vmatpush1.msra.mxu0 0.0
    %175 = vmatprep.subr.mxu0 0.0
    %176 = vmatpush1.msra.mxu0 0.0
    %177 = vmatprep.subr.mxu0 0.0
    %178 = vmatpush1.msra.mxu0 0.0
    %179 = vmatprep.mubr.f32.mxu0 0.0
    %180 = vmatmul.mubr.f32.gmra.mrb[0].mxu0 %v38
    %v181 = vpop.f32.mrb[0].mxu0
    %v182 = vadd.f32 0.0, %v181
    %v183 = vpop.f32.mrb[0].mxu0
    %184 = vdwg.mxu0
    %v185 = vadd.f32 %v113, %v182
    %186 = vst.msk [vmem:[#allocation7] sm:$0xff] %vm111, %v185
    // Predicated region
    $region14: #{tpu_custom_call.1} parent=1 // pred_check
      _
    $region15: #{tpu_custom_call.1} parent=1 // pred_check_branch
      %188 = sbr.rel (0) target = $region17
    $region16: #{tpu_custom_call.1} parent=1 // pred_region
      %s190 = ssub.s32 128, 128
      %191 = vsyncadd [#allocation5], %s190
      %s193 = sshll.u32 [#allocation6], 4
      %s194 = int_to_ptr.vmem [resolvable:$true] %s193
      %196 = dma.vmem_to_hbm [thread:$0]  %s194, 128, %s1, [#allocation5]
    $region17: #{tpu_custom_call.1} parent=1 // pred_fallthru
      _
    // Predicated region
    $region18: #{tpu_custom_call.1} parent=1 // pred_check
      _
    $region19: #{tpu_custom_call.1} parent=1 // pred_check_branch
      %198 = sbr.rel (0) target = $region21
    $region20: #{tpu_custom_call.1} parent=1 // pred_region
      %s200 = ssub.s32 128, 128
      %201 = vsyncadd [#allocation8], %s200
      %s203 = sshll.u32 [#allocation7], 4
      %s204 = int_to_ptr.vmem [resolvable:$true] %s203
      %206 = dma.vmem_to_hbm [thread:$0]  %s204, 128, %s2, [#allocation8]
    $region21: #{tpu_custom_call.1} parent=1 // pred_fallthru
      _
    // Predicated region
    $region22: #{tpu_custom_call.1} parent=1 // pred_check
      _
    $region23: #{tpu_custom_call.1} parent=1 // pred_check_branch
      %208 = sbr.rel (0) target = $region25
    $region24: #{tpu_custom_call.1} parent=1 // pred_region
      %209 = dma.done [#allocation5], 128
    $region25: #{tpu_custom_call.1} parent=1 // pred_fallthru
      _
    // Predicated region
    $region26: #{tpu_custom_call.1} parent=1 // pred_check
      _
    $region27: #{tpu_custom_call.1} parent=1 // pred_check_branch
      %211 = sbr.rel (0) target = $region29
    $region28: #{tpu_custom_call.1} parent=1 // pred_region
      %212 = dma.done [#allocation8], 128
    $region29: #{tpu_custom_call.1} parent=1 // pred_fallthru
      _
    %213 = vsyncpa [#allocation4], 1
    %214 = vsyncpa [#allocation5], 1
    %215 = vsyncpa [#allocation8], 1

</llo_original>
